<compile_context>
chip_gen: v7x
topology: tpu7x:2x2x1
jax: 0.10.0
libtpu: 0.0.40
codegen_flags: <defaults>
</compile_context>

<pallas_src>
import functools

import jax
import jax.numpy as jnp
from jax.experimental import pallas as pl
from jax.experimental.pallas import tpu as pltpu


def _round_up(x: int, m: int) -> int:
    return ((x + m - 1) // m) * m


def _cdiv(a: int, b: int) -> int:
    return (a + b - 1) // b


# ---------------------------------------------------------------------------
# Fused MLP kernel: out = tanh(W_L(...relu(W_1 x + b_1)...) + b_L)
# ---------------------------------------------------------------------------
def _fused_mlp_kernel(x_ref, *refs, num_layers: int):
    """refs = (w0, b0, w1, b1, ..., w_{L-1}, b_{L-1}, o_ref), all in VMEM."""
    o_ref = refs[-1]
    wb = refs[:-1]
    h = x_ref[...]                                        # [tile_b, dim_states]
    for i in range(num_layers):                           # unrolled (small L)
        w = wb[2 * i][...]                                # [in_f, out_f]
        b = wb[2 * i + 1][...]                            # [1, out_f]
        acc = jnp.dot(h, w, preferred_element_type=jnp.float32)
        acc = acc + b.astype(jnp.float32)
        if i < num_layers - 1:
            acc = jnp.maximum(acc, 0.0)                   # ReLU (VPU)
        else:
            acc = jnp.tanh(acc)                           # Tanh (EUP)
        h = acc.astype(w.dtype)                           # back to I/O dtype
    o_ref[...] = h.astype(o_ref.dtype)


# ---------------------------------------------------------------------------
# Parameter construction (mirror nn.Linear init; weights stored [in, out])
# ---------------------------------------------------------------------------
def init_actor_policy_params(key, dim_states, hidden_layer_sizes, dim_actions,
                             dtype=jnp.float32):
    dims = [dim_states] + list(hidden_layer_sizes) + [dim_actions]
    params = []
    for i in range(len(dims) - 1):
        in_f, out_f = dims[i], dims[i + 1]
        key, kw, kb = jax.random.split(key, 3)
        bound = 1.0 / float(in_f) ** 0.5
        w = jax.random.uniform(kw, (in_f, out_f), jnp.float32, -bound, bound)
        b = jax.random.uniform(kb, (1, out_f), jnp.float32, -bound, bound)
        params.append((w.astype(dtype), b.astype(dtype)))
    return params


# ---------------------------------------------------------------------------
# Forward pass: one fused pallas_call, 1-D grid over the batch only
# ---------------------------------------------------------------------------
def actor_policy_forward(state, params, *, batch_tile=2048, min_grid=1):
    """Forward pass of ActorPolicyNetwork (ReLU hidden layers, Tanh output).

    `min_grid=2` is recommended on v7x (2 TensorCores) for large batches.
    Use bf16 params for the I/O path on v6e/v7x; keep f32 on v5e.
    """
    B, dim_states = state.shape
    num_layers = len(params)
    dim_actions = params[-1][0].shape[1]
    io_dtype = params[0][0].dtype

    sublane = 8 if jnp.dtype(io_dtype).itemsize == 4 else 16
    batch_tile = max(_round_up(int(batch_tile), sublane), sublane)

    # Choose the number of tiles first, then the smallest sublane-aligned tile
    # that covers the batch -> at most (sublane-1) wasted rows per tile.
    n_tiles = max(int(min_grid), _cdiv(B, batch_tile))
    tile_b = _round_up(_cdiv(B, n_tiles), sublane)
    b_pad = n_tiles * tile_b

    x = state.astype(io_dtype)
    if b_pad != B:
        x = jnp.pad(x, ((0, b_pad - B), (0, 0)))

    # Activation tiled over batch; weights/biases full-array blocks, resident
    # in VMEM with constant index_maps.
    flat_params = []
    in_specs = [pl.BlockSpec((tile_b, dim_states), lambda i: (i, 0))]
    for w, b in params:
        flat_params += [w, b]
        in_specs.append(pl.BlockSpec(w.shape, lambda i: (0, 0)))
        in_specs.append(pl.BlockSpec(b.shape, lambda i: (0, 0)))

    # Only raise the scoped-VMEM limit if the footprint is actually large
    # (relevant for v5e's 16 MiB default at very big tiles).
    itemsize = jnp.dtype(io_dtype).itemsize
    est_vmem = (2 * tile_b * (dim_states + dim_actions) * itemsize        # act blocks, 2-buffered
                + 2 * sum(w.size + b.size for w, b in params) * itemsize  # weight buffers
                + (2 << 20))                                              # compiler scratch headroom
    vmem_limit = int(min(2 * est_vmem, 48 << 20)) if est_vmem > (12 << 20) else None

    kernel = functools.partial(_fused_mlp_kernel, num_layers=num_layers)
    out = pl.pallas_call(
        kernel,
        out_shape=jax.ShapeDtypeStruct((b_pad, dim_actions), io_dtype),
        grid=(n_tiles,),
        in_specs=in_specs,
        out_specs=pl.BlockSpec((tile_b, dim_actions), lambda i: (i, 0)),
        compiler_params=pltpu.CompilerParams(
            dimension_semantics=("parallel",),
            vmem_limit_bytes=vmem_limit),
    )(x, *flat_params)

    return out[:B] if b_pad != B else out


# TODO(synk): optimizer/backward (Adam update, grad-norm clipping) are
# training-side and not part of the forward pass; not implemented in Pallas.


# ---------------------------------------------------------------------------
# Demo / correctness check
# ---------------------------------------------------------------------------
def _reference_forward(state, params):
    out = state.astype(jnp.float32)
    for i, (w, b) in enumerate(params):
        out = out @ w.astype(jnp.float32) + b.astype(jnp.float32)
        out = jnp.tanh(out) if i == len(params) - 1 else jnp.maximum(out, 0.0)
    return out


if __name__ == "__main__":
    dim_states, hidden_layer_sizes, dim_actions = 8, [32, 32], 4

    key = jax.random.PRNGKey(0)
    key_params, key_x1, key_x2, key_x3 = jax.random.split(key, 4)

    params = init_actor_policy_params(
        key_params, dim_states, hidden_layer_sizes, dim_actions)

    fwd = jax.jit(actor_policy_forward,
                  static_argnames=("batch_tile", "min_grid"))

    # 1) tiny batch, single grid step, f32
    x1 = jax.random.normal(key_x1, (2, dim_states), jnp.float32)
    o1 = jax.block_until_ready(fwd(x1, params))
    assert o1.shape == (2, dim_actions)
    assert jnp.allclose(o1, _reference_forward(x1, params), atol=1e-5, rtol=1e-5)

    # 2) batched path: grid > 1 (min_grid exercised), ragged batch padding, f32
    x2 = jax.random.normal(key_x2, (300, dim_states), jnp.float32)
    o2 = jax.block_until_ready(fwd(x2, params, batch_tile=128, min_grid=2))
    assert o2.shape == (300, dim_actions)
    assert jnp.allclose(o2, _reference_forward(x2, params), atol=1e-5, rtol=1e-5)

    # 3) bf16 I/O path (the v6e/v7x recommendation); accumulation stays f32
    params_bf16 = [(w.astype(jnp.bfloat16), b.astype(jnp.bfloat16))
                   for w, b in params]
    x3 = jax.random.normal(key_x3, (64, dim_states), jnp.float32)
    o3 = jax.block_until_ready(fwd(x3, params_bf16))
    assert o3.shape == (64, dim_actions)
    assert jnp.allclose(o3.astype(jnp.float32),
                        _reference_forward(x3, params), atol=5e-2, rtol=5e-2)

    print("KERNEL_OK")
</pallas_src>

<mosaic_0001>
module attributes {stable_mosaic.version = 11 : i64} {
  func.func @_fused_mlp_kernel(%arg0: i32, %arg1: memref<8x8xf32, #tpu.memory_space<vmem>>, %arg2: memref<8x32xf32, #tpu.memory_space<vmem>>, %arg3: memref<1x32xf32, #tpu.memory_space<vmem>>, %arg4: memref<32x32xf32, #tpu.memory_space<vmem>>, %arg5: memref<1x32xf32, #tpu.memory_space<vmem>>, %arg6: memref<32x4xf32, #tpu.memory_space<vmem>>, %arg7: memref<1x4xf32, #tpu.memory_space<vmem>>, %arg8: memref<8x4xf32, #tpu.memory_space<vmem>>) attributes {dimension_semantics = [#tpu.dimension_semantics<parallel>], iteration_bounds = array<i64: 1>, scalar_prefetch = 0 : i64, scratch_operands = 0 : i64, tpu.core_type = #tpu.core_type<tc>, window_params = [{transform_indices = @transform_0, window_bounds = array<i64: 8, 8>}, {pipeline_mode = #tpu.pipeline_mode<synchronous>, transform_indices = @transform_1, window_bounds = array<i64: 8, 32>}, {pipeline_mode = #tpu.pipeline_mode<synchronous>, transform_indices = @transform_2, window_bounds = array<i64: 1, 32>}, {pipeline_mode = #tpu.pipeline_mode<synchronous>, transform_indices = @transform_3, window_bounds = array<i64: 32, 32>}, {pipeline_mode = #tpu.pipeline_mode<synchronous>, transform_indices = @transform_4, window_bounds = array<i64: 1, 32>}, {pipeline_mode = #tpu.pipeline_mode<synchronous>, transform_indices = @transform_5, window_bounds = array<i64: 32, 4>}, {pipeline_mode = #tpu.pipeline_mode<synchronous>, transform_indices = @transform_6, window_bounds = array<i64: 1, 4>}, {transform_indices = @transform_7, window_bounds = array<i64: 8, 4>}]} {
    %c0 = arith.constant 0 : index
    %c0_0 = arith.constant 0 : index
    %0 = vector.load %arg1[%c0, %c0_0] : memref<8x8xf32, #tpu.memory_space<vmem>>, vector<8x8xf32>
    %c0_1 = arith.constant 0 : index
    %c0_2 = arith.constant 0 : index
    %1 = vector.load %arg2[%c0_1, %c0_2] : memref<8x32xf32, #tpu.memory_space<vmem>>, vector<8x32xf32>
    %c0_3 = arith.constant 0 : index
    %c0_4 = arith.constant 0 : index
    %2 = vector.load %arg3[%c0_3, %c0_4] : memref<1x32xf32, #tpu.memory_space<vmem>>, vector<1x32xf32>
    %cst = arith.constant dense<0.000000e+00> : vector<8x32xf32>
    %3 = tpu.matmul %0, %1, %cst {dimension_numbers = #tpu.dot_dimension_numbers<[1], [0], [0], [1], [0, 0, 1, 1], [], []>} : vector<8x8xf32>, vector<8x32xf32>, vector<8x32xf32> -> vector<8x32xf32>
    %4 = vector.broadcast %2 : vector<1x32xf32> to vector<8x32xf32>
    %5 = arith.addf %3, %4 : vector<8x32xf32>
    %cst_5 = arith.constant 0.000000e+00 : f32
    %6 = vector.broadcast %cst_5 : f32 to vector<8x32xf32>
    %7 = arith.maximumf %5, %6 : vector<8x32xf32>
    %c0_6 = arith.constant 0 : index
    %c0_7 = arith.constant 0 : index
    %8 = vector.load %arg4[%c0_6, %c0_7] : memref<32x32xf32, #tpu.memory_space<vmem>>, vector<32x32xf32>
    %c0_8 = arith.constant 0 : index
    %c0_9 = arith.constant 0 : index
    %9 = vector.load %arg5[%c0_8, %c0_9] : memref<1x32xf32, #tpu.memory_space<vmem>>, vector<1x32xf32>
    %cst_10 = arith.constant dense<0.000000e+00> : vector<8x32xf32>
    %10 = tpu.matmul %7, %8, %cst_10 {dimension_numbers = #tpu.dot_dimension_numbers<[1], [0], [0], [1], [0, 0, 1, 1], [], []>} : vector<8x32xf32>, vector<32x32xf32>, vector<8x32xf32> -> vector<8x32xf32>
    %11 = vector.broadcast %9 : vector<1x32xf32> to vector<8x32xf32>
    %12 = arith.addf %10, %11 : vector<8x32xf32>
    %cst_11 = arith.constant 0.000000e+00 : f32
    %13 = vector.broadcast %cst_11 : f32 to vector<8x32xf32>
    %14 = arith.maximumf %12, %13 : vector<8x32xf32>
    %c0_12 = arith.constant 0 : index
    %c0_13 = arith.constant 0 : index
    %15 = vector.load %arg6[%c0_12, %c0_13] : memref<32x4xf32, #tpu.memory_space<vmem>>, vector<32x4xf32>
    %c0_14 = arith.constant 0 : index
    %c0_15 = arith.constant 0 : index
    %16 = vector.load %arg7[%c0_14, %c0_15] : memref<1x4xf32, #tpu.memory_space<vmem>>, vector<1x4xf32>
    %cst_16 = arith.constant dense<0.000000e+00> : vector<8x4xf32>
    %17 = tpu.matmul %14, %15, %cst_16 {dimension_numbers = #tpu.dot_dimension_numbers<[1], [0], [0], [1], [0, 0, 1, 1], [], []>} : vector<8x32xf32>, vector<32x4xf32>, vector<8x4xf32> -> vector<8x4xf32>
    %18 = vector.broadcast %16 : vector<1x4xf32> to vector<8x4xf32>
    %19 = arith.addf %17, %18 : vector<8x4xf32>
    %20 = math.tanh %19 : vector<8x4xf32>
    %c0_17 = arith.constant 0 : index
    %c0_18 = arith.constant 0 : index
    %21 = vector.load %arg8[%c0_17, %c0_18] : memref<8x4xf32, #tpu.memory_space<vmem>>, vector<8x4xf32>
    tpu.vector_store %arg8[%c0_17, %c0_18], %20 {strides = array<i32>} : memref<8x4xf32, #tpu.memory_space<vmem>>, vector<8x4xf32>,
    return
  }
  func.func @transform_0(%arg0: i32) -> (i32, i32) {
    %c0_i32 = arith.constant 0 : i32
    %c0_i32_0 = arith.constant 0 : i32
    return %arg0, %c0_i32 : i32, i32
  }
  func.func @transform_1(%arg0: i32) -> (i32, i32) {
    %c0_i32 = arith.constant 0 : i32
    %c0_i32_0 = arith.constant 0 : i32
    %c0_i32_1 = arith.constant 0 : i32
    return %c0_i32, %c0_i32_0 : i32, i32
  }
  func.func @transform_2(%arg0: i32) -> (i32, i32) {
    %c0_i32 = arith.constant 0 : i32
    %c0_i32_0 = arith.constant 0 : i32
    %c0_i32_1 = arith.constant 0 : i32
    return %c0_i32, %c0_i32_0 : i32, i32
  }
  func.func @transform_3(%arg0: i32) -> (i32, i32) {
    %c0_i32 = arith.constant 0 : i32
    %c0_i32_0 = arith.constant 0 : i32
    %c0_i32_1 = arith.constant 0 : i32
    return %c0_i32, %c0_i32_0 : i32, i32
  }
  func.func @transform_4(%arg0: i32) -> (i32, i32) {
    %c0_i32 = arith.constant 0 : i32
    %c0_i32_0 = arith.constant 0 : i32
    %c0_i32_1 = arith.constant 0 : i32
    return %c0_i32, %c0_i32_0 : i32, i32
  }
  func.func @transform_5(%arg0: i32) -> (i32, i32) {
    %c0_i32 = arith.constant 0 : i32
    %c0_i32_0 = arith.constant 0 : i32
    %c0_i32_1 = arith.constant 0 : i32
    return %c0_i32, %c0_i32_0 : i32, i32
  }
  func.func @transform_6(%arg0: i32) -> (i32, i32) {
    %c0_i32 = arith.constant 0 : i32
    %c0_i32_0 = arith.constant 0 : i32
    %c0_i32_1 = arith.constant 0 : i32
    return %c0_i32, %c0_i32_0 : i32, i32
  }
  func.func @transform_7(%arg0: i32) -> (i32, i32) {
    %c0_i32 = arith.constant 0 : i32
    %c0_i32_0 = arith.constant 0 : i32
    return %arg0, %c0_i32 : i32, i32
  }
}

</mosaic_0001>

<llo_original>
// kernel: actor_policy_forward.1
$region0: #{actor_policy_forward.1}
  #allocation0 [shape = 'u32[]', space=smem, size = 0x4, offset = 0x4, fixed_abs, tag = 'smem constant byte address 0x4 - core index']
  #allocation1 [shape = 'u32[144,128]{1,0:T(1,128)}', space=vmem, size = 0x12000, scoped, tag = 'internal scratch']
  %s0 = inlined_call_operand.vmem [shape: f32[8,8], index: 0, kind: input, shape index: {}]
  %s1 = inlined_call_operand.vmem [shape: f32[8,32], index: 1, kind: input, shape index: {}]
  %s2 = inlined_call_operand.vmem [shape: f32[1,32], index: 2, kind: input, shape index: {}]
  %s3 = inlined_call_operand.vmem [shape: f32[32,32], index: 3, kind: input, shape index: {}]
  %s4 = inlined_call_operand.vmem [shape: f32[1,32], index: 4, kind: input, shape index: {}]
  %s5 = inlined_call_operand.vmem [shape: f32[32,4], index: 5, kind: input, shape index: {}]
  %s6 = inlined_call_operand.vmem [shape: f32[1,4], index: 6, kind: input, shape index: {}]
  %s7 = inlined_call_operand.vmem [shape: f32[8,4], index: 7, kind: output, shape index: {}]
  %s8 = sld [smem:[#allocation0]]
  $region38: #{actor_policy_forward.1} parent=0
    _
  %s10 = ssub.s32 1, %s8
  %s11 = scalar_select 0, %s10, %s8
  // Predicated region
  $region2: #{actor_policy_forward.1} parent=0 // pred_check
    _
  $region3: #{actor_policy_forward.1} parent=0 // pred_check_branch
    %13 = sbr.rel (0) target = $region5
  $region4: #{actor_policy_forward.1} parent=0 // pred_region
    _
  $region5: #{actor_policy_forward.1} parent=0 // pred_fallthru
    _
  // Predicated region
  $region6: #{actor_policy_forward.1} parent=0 // pred_check
    _
  $region7: #{actor_policy_forward.1} parent=0 // pred_check_branch
    %15 = sbr.rel (0) target = $region9
  $region8: #{actor_policy_forward.1} parent=0 // pred_region
    _
  $region9: #{actor_policy_forward.1} parent=0 // pred_fallthru
    _
  // Predicated region
  $region10: #{actor_policy_forward.1} parent=0 // pred_check
    _
  $region11: #{actor_policy_forward.1} parent=0 // pred_check_branch
    %17 = sbr.rel (0) target = $region13
  $region12: #{actor_policy_forward.1} parent=0 // pred_region
    _
  $region13: #{actor_policy_forward.1} parent=0 // pred_fallthru
    _
  // Predicated region
  $region14: #{actor_policy_forward.1} parent=0 // pred_check
    _
  $region15: #{actor_policy_forward.1} parent=0 // pred_check_branch
    %19 = sbr.rel (0) target = $region17
  $region16: #{actor_policy_forward.1} parent=0 // pred_region
    _
  $region17: #{actor_policy_forward.1} parent=0 // pred_fallthru
    _
  // Predicated region
  $region18: #{actor_policy_forward.1} parent=0 // pred_check
    _
  $region19: #{actor_policy_forward.1} parent=0 // pred_check_branch
    %21 = sbr.rel (0) target = $region21
  $region20: #{actor_policy_forward.1} parent=0 // pred_region
    _
  $region21: #{actor_policy_forward.1} parent=0 // pred_fallthru
    _
  // Predicated region
  $region22: #{actor_policy_forward.1} parent=0 // pred_check
    _
  $region23: #{actor_policy_forward.1} parent=0 // pred_check_branch
    %23 = sbr.rel (0) target = $region25
  $region24: #{actor_policy_forward.1} parent=0 // pred_region
    _
  $region25: #{actor_policy_forward.1} parent=0 // pred_fallthru
    _
  // Predicated region
  $region26: #{actor_policy_forward.1} parent=0 // pred_check
    _
  $region27: #{actor_policy_forward.1} parent=0 // pred_check_branch
    %25 = sbr.rel (0) target = $region29
  $region28: #{actor_policy_forward.1} parent=0 // pred_region
    _
  $region29: #{actor_policy_forward.1} parent=0 // pred_fallthru
    _
  %v26 = vld [vmem:[%s0] sm:$0xff]
  %v27 = vld [vmem:[%s1] sm:$0xff]
  %v28 = vld [vmem:[%s2] sm:$0x1]
  %v30 = vlaneseq
  %v31 = vshrl.u32 %v30, 7
  %v32 = vsub.s32 0, %v31
  %v33 = vrot.slane %v28, %v32
  %vm35 = vcmask 64512
  %v37 = vsel %vm35, %v26, 0
  %39 = vmatprep.subr.mxu0 0.0
  %40 = vmatpush1.msra.mxu0 %v27
  %41 = vmatprep.subr.mxu0 0.0
  %42 = vmatpush1.msra.mxu0 0.0
  %43 = vmatprep.subr.mxu0 0.0
  %44 = vmatpush1.msra.mxu0 0.0
  %45 = vmatprep.subr.mxu0 0.0
  %46 = vmatpush1.msra.mxu0 0.0
  %47 = vmatprep.subr.mxu0 0.0
  %48 = vmatpush1.msra.mxu0 0.0
  %49 = vmatprep.subr.mxu0 0.0
  %50 = vmatpush1.msra.mxu0 0.0
  %51 = vmatprep.subr.mxu0 0.0
  %52 = vmatpush1.msra.mxu0 0.0
  %53 = vmatprep.subr.mxu0 0.0
  %54 = vmatpush1.msra.mxu0 0.0
  %55 = vmatprep.subr.mxu0 0.0
  %56 = vmatpush1.msra.mxu0 0.0
  %57 = vmatprep.subr.mxu0 0.0
  %58 = vmatpush1.msra.mxu0 0.0
  %59 = vmatprep.subr.mxu0 0.0
  %60 = vmatpush1.msra.mxu0 0.0
  %61 = vmatprep.subr.mxu0 0.0
  %62 = vmatpush1.msra.mxu0 0.0
  %63 = vmatprep.subr.mxu0 0.0
  %64 = vmatpush1.msra.mxu0 0.0
  %65 = vmatprep.subr.mxu0 0.0
  %66 = vmatpush1.msra.mxu0 0.0
  %67 = vmatprep.subr.mxu0 0.0
  %68 = vmatpush1.msra.mxu0 0.0
  %69 = vmatprep.subr.mxu0 0.0
  %70 = vmatpush1.msra.mxu0 0.0
  %71 = vmatprep.subr.mxu0 0.0
  %72 = vmatpush1.msra.mxu0 0.0
  %73 = vmatprep.subr.mxu0 0.0
  %74 = vmatpush1.msra.mxu0 0.0
  %75 = vmatprep.subr.mxu0 0.0
  %76 = vmatpush1.msra.mxu0 0.0
  %77 = vmatprep.subr.mxu0 0.0
  %78 = vmatpush1.msra.mxu0 0.0
  %79 = vmatprep.subr.mxu0 0.0
  %80 = vmatpush1.msra.mxu0 0.0
  %81 = vmatprep.subr.mxu0 0.0
  %82 = vmatpush1.msra.mxu0 0.0
  %83 = vmatprep.subr.mxu0 0.0
  %84 = vmatpush1.msra.mxu0 0.0
  %85 = vmatprep.subr.mxu0 0.0
  %86 = vmatpush1.msra.mxu0 0.0
  %87 = vmatprep.subr.mxu0 0.0
  %88 = vmatpush1.msra.mxu0 0.0
  %89 = vmatprep.subr.mxu0 0.0
  %90 = vmatpush1.msra.mxu0 0.0
  %91 = vmatprep.subr.mxu0 0.0
  %92 = vmatpush1.msra.mxu0 0.0
  %93 = vmatprep.subr.mxu0 0.0
  %94 = vmatpush1.msra.mxu0 0.0
  %95 = vmatprep.subr.mxu0 0.0
  %96 = vmatpush1.msra.mxu0 0.0
  %97 = vmatprep.subr.mxu0 0.0
  %98 = vmatpush1.msra.mxu0 0.0
  %99 = vmatprep.subr.mxu0 0.0
  %100 = vmatpush1.msra.mxu0 0.0
  %101 = vmatprep.subr.mxu0 0.0
  %102 = vmatpush1.msra.mxu0 0.0
  %103 = vmatprep.mubr.f32.mxu0 0.0
  %104 = vmatmul.mubr.f32.gmra.mrb[0].mxu0 %v37
  %v105 = vpop.f32.mrb[0].mxu0
  %v106 = vadd.f32 %v33, %v105
  %v107 = vpop.f32.mrb[0].mxu0
  %108 = vdwg.mxu0
  %v109 = vmax.f32 %v106, 0.0
  %v110 = vld [vmem:[%s3] sm:$0xff]
  %v111 = vld [vmem:[%s3 + $0x8] sm:$0xff]
  %v112 = vld [vmem:[%s3 + $0x10] sm:$0xff]
  %v113 = vld [vmem:[%s3 + $0x18] sm:$0xff]
  %v114 = vld [vmem:[%s4] sm:$0x1]
  %v116 = vlaneseq
  %v117 = vshrl.u32 %v116, 7
  %v118 = vsub.s32 0, %v117
  %v119 = vrot.slane %v114, %v118
  %vm121 = vcmask 261120
  %v123 = vsel %vm121, %v109, 0
  %125 = vmatprep.subr.mxu0 0.0
  %126 = vmatpush1.msra.mxu0 %v110
  %127 = vmatprep.subr.mxu0 0.0
  %128 = vmatpush1.msra.mxu0 %v111
  %129 = vmatprep.subr.mxu0 0.0
  %130 = vmatpush1.msra.mxu0 %v112
  %131 = vmatprep.subr.mxu0 0.0
  %132 = vmatpush1.msra.mxu0 %v113
  %133 = vmatprep.subr.mxu0 0.0
  %134 = vmatpush1.msra.mxu0 0.0
  %135 = vmatprep.subr.mxu0 0.0
  %136 = vmatpush1.msra.mxu0 0.0
  %137 = vmatprep.subr.mxu0 0.0
  %138 = vmatpush1.msra.mxu0 0.0
  %139 = vmatprep.subr.mxu0 0.0
  %140 = vmatpush1.msra.mxu0 0.0
  %141 = vmatprep.subr.mxu0 0.0
  %142 = vmatpush1.msra.mxu0 0.0
  %143 = vmatprep.subr.mxu0 0.0
  %144 = vmatpush1.msra.mxu0 0.0
  %145 = vmatprep.subr.mxu0 0.0
  %146 = vmatpush1.msra.mxu0 0.0
  %147 = vmatprep.subr.mxu0 0.0
  %148 = vmatpush1.msra.mxu0 0.0
  %149 = vmatprep.subr.mxu0 0.0
  %150 = vmatpush1.msra.mxu0 0.0
  %151 = vmatprep.subr.mxu0 0.0
  %152 = vmatpush1.msra.mxu0 0.0
  %153 = vmatprep.subr.mxu0 0.0
  %154 = vmatpush1.msra.mxu0 0.0
  %155 = vmatprep.subr.mxu0 0.0
  %156 = vmatpush1.msra.mxu0 0.0
  %157 = vmatprep.subr.mxu0 0.0
  %158 = vmatpush1.msra.mxu0 0.0
  %159 = vmatprep.subr.mxu0 0.0
  %160 = vmatpush1.msra.mxu0 0.0
  %161 = vmatprep.subr.mxu0 0.0
  %162 = vmatpush1.msra.mxu0 0.0
  %163 = vmatprep.subr.mxu0 0.0
  %164 = vmatpush1.msra.mxu0 0.0
  %165 = vmatprep.subr.mxu0 0.0
  %166 = vmatpush1.msra.mxu0 0.0
  %167 = vmatprep.subr.mxu0 0.0
  %168 = vmatpush1.msra.mxu0 0.0
  %169 = vmatprep.subr.mxu0 0.0
  %170 = vmatpush1.msra.mxu0 0.0
  %171 = vmatprep.subr.mxu0 0.0
  %172 = vmatpush1.msra.mxu0 0.0
  %173 = vmatprep.subr.mxu0 0.0
  %174 = vmatpush1.msra.mxu0 0.0
  %175 = vmatprep.subr.mxu0 0.0
  %176 = vmatpush1.msra.mxu0 0.0
  %177 = vmatprep.subr.mxu0 0.0
  %178 = vmatpush1.msra.mxu0 0.0
  %179 = vmatprep.subr.mxu0 0.0
  %180 = vmatpush1.msra.mxu0 0.0
  %181 = vmatprep.subr.mxu0 0.0
  %182 = vmatpush1.msra.mxu0 0.0
  %183 = vmatprep.subr.mxu0 0.0
  %184 = vmatpush1.msra.mxu0 0.0
  %185 = vmatprep.subr.mxu0 0.0
  %186 = vmatpush1.msra.mxu0 0.0
  %187 = vmatprep.subr.mxu0 0.0
  %188 = vmatpush1.msra.mxu0 0.0
  %189 = vmatprep.mubr.f32.mxu0 0.0
  %190 = vmatmul.mubr.f32.gmra.mrb[0].mxu0 %v123
  %v191 = vpop.f32.mrb[0].mxu0
  %v192 = vadd.f32 %v119, %v191
  %v193 = vpop.f32.mrb[0].mxu0
  %194 = vdwg.mxu0
  %v195 = vmax.f32 %v192, 0.0
  %v196 = vld [vmem:[%s5] sm:$0xff]
  %v197 = vld [vmem:[%s5 + $0x8] sm:$0xff]
  %v198 = vld [vmem:[%s5 + $0x10] sm:$0xff]
  %v199 = vld [vmem:[%s5 + $0x18] sm:$0xff]
  %v200 = vld [vmem:[%s6] sm:$0x1]
  %v202 = vlaneseq
  %v203 = vshrl.u32 %v202, 7
  %v204 = vsub.s32 0, %v203
  %v205 = vrot.slane %v200, %v204
  %v208 = vsel %vm121, %v195, 0
  %210 = vmatprep.subr.mxu0 0.0
  %211 = vmatpush1.msra.mxu0 %v196
  %212 = vmatprep.subr.mxu0 0.0
  %213 = vmatpush1.msra.mxu0 %v197
  %214 = vmatprep.subr.mxu0 0.0
  %215 = vmatpush1.msra.mxu0 %v198
  %216 = vmatprep.subr.mxu0 0.0
  %217 = vmatpush1.msra.mxu0 %v199
  %218 = vmatprep.subr.mxu0 0.0
  %219 = vmatpush1.msra.mxu0 0.0
  %220 = vmatprep.subr.mxu0 0.0
  %221 = vmatpush1.msra.mxu0 0.0
  %222 = vmatprep.subr.mxu0 0.0
  %223 = vmatpush1.msra.mxu0 0.0
  %224 = vmatprep.subr.mxu0 0.0
  %225 = vmatpush1.msra.mxu0 0.0
  %226 = vmatprep.subr.mxu0 0.0
  %227 = vmatpush1.msra.mxu0 0.0
  %228 = vmatprep.subr.mxu0 0.0
  %229 = vmatpush1.msra.mxu0 0.0
  %230 = vmatprep.subr.mxu0 0.0
  %231 = vmatpush1.msra.mxu0 0.0
  %232 = vmatprep.subr.mxu0 0.0
  %233 = vmatpush1.msra.mxu0 0.0
  %234 = vmatprep.subr.mxu0 0.0
  %235 = vmatpush1.msra.mxu0 0.0
  %236 = vmatprep.subr.mxu0 0.0
  %237 = vmatpush1.msra.mxu0 0.0
  %238 = vmatprep.subr.mxu0 0.0
  %239 = vmatpush1.msra.mxu0 0.0
  %240 = vmatprep.subr.mxu0 0.0
  %241 = vmatpush1.msra.mxu0 0.0
  %242 = vmatprep.subr.mxu0 0.0
  %243 = vmatpush1.msra.mxu0 0.0
  %244 = vmatprep.subr.mxu0 0.0
  %245 = vmatpush1.msra.mxu0 0.0
  %246 = vmatprep.subr.mxu0 0.0
  %247 = vmatpush1.msra.mxu0 0.0
  %248 = vmatprep.subr.mxu0 0.0
  %249 = vmatpush1.msra.mxu0 0.0
  %250 = vmatprep.subr.mxu0 0.0
  %251 = vmatpush1.msra.mxu0 0.0
  %252 = vmatprep.subr.mxu0 0.0
  %253 = vmatpush1.msra.mxu0 0.0
  %254 = vmatprep.subr.mxu0 0.0
  %255 = vmatpush1.msra.mxu0 0.0
  %256 = vmatprep.subr.mxu0 0.0
  %257 = vmatpush1.msra.mxu0 0.0
  %258 = vmatprep.subr.mxu0 0.0
  %259 = vmatpush1.msra.mxu0 0.0
  %260 = vmatprep.subr.mxu0 0.0
  %261 = vmatpush1.msra.mxu0 0.0
  %262 = vmatprep.subr.mxu0 0.0
  %263 = vmatpush1.msra.mxu0 0.0
  %264 = vmatprep.subr.mxu0 0.0
  %265 = vmatpush1.msra.mxu0 0.0
  %266 = vmatprep.subr.mxu0 0.0
  %267 = vmatpush1.msra.mxu0 0.0
  %268 = vmatprep.subr.mxu0 0.0
  %269 = vmatpush1.msra.mxu0 0.0
  %270 = vmatprep.subr.mxu0 0.0
  %271 = vmatpush1.msra.mxu0 0.0
  %272 = vmatprep.subr.mxu0 0.0
  %273 = vmatpush1.msra.mxu0 0.0
  %274 = vmatprep.mubr.f32.mxu0 0.0
  %275 = vmatmul.mubr.f32.gmra.mrb[0].mxu0 %v208
  %v276 = vpop.f32.mrb[0].mxu0
  %v277 = vadd.f32 %v205, %v276
  %v278 = vpop.f32.mrb[0].mxu0
  %279 = vdwg.mxu0
  %v280 = vtanh.pop %v277
  %vm281 = vcmask 31744
  %282 = vst.msk [vmem:[%s7] sm:$0xff] %vm281, %v280
  // Predicated region
  $region30: #{actor_policy_forward.1} parent=0 // pred_check
    _
  $region31: #{actor_policy_forward.1} parent=0 // pred_check_branch
    %284 = sbr.rel (0) target = $region33
  $region32: #{actor_policy_forward.1} parent=0 // pred_region
    _
  $region33: #{actor_policy_forward.1} parent=0 // pred_fallthru
    _
  // Predicated region
  $region34: #{actor_policy_forward.1} parent=0 // pred_check
    _
  $region35: #{actor_policy_forward.1} parent=0 // pred_check_branch
    %286 = sbr.rel (0) target = $region37
  $region36: #{actor_policy_forward.1} parent=0 // pred_region
    _
  $region37: #{actor_policy_forward.1} parent=0 // pred_fallthru
    _

</llo_original>
